<compile_context>
chip_gen: v7x
topology: tpu7x:2x2x1
jax: 0.10.0
libtpu: 0.0.40
codegen_flags: <defaults>
</compile_context>

<pallas_src>
import jax
import jax.numpy as jnp
from jax.experimental import pallas as pl
from jax.experimental.pallas import tpu as pltpu


def _round_up(x, m):
    return ((x + m - 1) // m) * m


def _mlp_fused_kernel(*refs):
    # refs = (x_ref, w0_ref, b0_ref, w1_ref, b1_ref, ..., o_ref)
    x_ref, o_ref = refs[0], refs[-1]
    wb_refs = refs[1:-1]
    h = x_ref[...]                                       # bf16 (tm, in_pad)
    for i in range(0, len(wb_refs), 2):                  # static Python unroll
        w_ref, b_ref = wb_refs[i], wb_refs[i + 1]
        acc = jnp.dot(h.astype(jnp.bfloat16), w_ref[...],
                      preferred_element_type=jnp.float32)  # bf16 MXU, f32 acc
        h = jnp.maximum(acc + b_ref[...], 0.0)           # bias + ReLU in f32
    o_ref[...] = h.astype(o_ref.dtype)


def init_mlp_params(key, blocks, in_features=28 * 28, n_classes=10):
    """Deterministic params matching nn.Linear shapes: W (out,in), b (out,)."""
    ins = [in_features, *blocks]
    outs = [*blocks, n_classes]
    params = []
    for idx in range(len(blocks) + 1):
        key, kw, kb = jax.random.split(key, 3)
        bound = 1.0 / jnp.sqrt(ins[idx])                 # PyTorch default scale
        w = jax.random.uniform(kw, (outs[idx], ins[idx]),
                               minval=-bound, maxval=bound, dtype=jnp.float32)
        b = jax.random.uniform(kb, (outs[idx],),
                               minval=-bound, maxval=bound, dtype=jnp.float32)
        params.append((w, b))
    return params


def prepare_params(params, in_features):
    """One-time prep (off the hot path):
      * transpose each W to (in, out),
      * zero-pad the first layer's K dim to a multiple of 128 (784 -> 896) and
        every output width to a multiple of 128 (lane-dense outputs),
      * cast weights to bfloat16 (biases stay f32).
    Padded rows/cols are exact zeros: padded lanes stay 0 through ReLU and
    never contaminate the next layer; padded logits are sliced in the wrapper.
    Returns (prepared_params, in_pad)."""
    in_pad = _round_up(in_features, 128)
    prepared = []
    prev_out_pad = in_pad
    for (w, b) in params:
        out_f, in_f = w.shape
        out_pad = _round_up(out_f, 128)
        w_t = jnp.zeros((prev_out_pad, out_pad), jnp.float32)
        w_t = w_t.at[:in_f, :out_f].set(jnp.transpose(w).astype(jnp.float32))
        b_p = jnp.zeros((1, out_pad), jnp.float32).at[0, :out_f].set(
            b.astype(jnp.float32))
        prepared.append((w_t.astype(jnp.bfloat16), b_p))
        prev_out_pad = out_pad
    return prepared, in_pad


def _pick_batch_tile(B):
    """Batch tile, multiple of 16 (bf16 sublane packing).  Large tiles amortize
    the ~0.35us/step pipeline overhead; once the batch is worth splitting keep
    >= 2 grid steps so the parallel axis shards across v7x's 2 TensorCores.
    Capped at 1024 to bound VMEM (with the explicit limit below)."""
    if B <= 32:
        return _round_up(max(B, 1), 16)
    return min(_round_up((B + 1) // 2, 16), 1024)


def mlp_forward(x_nchw, prepared_params, in_pad, n_classes):
    B = x_nchw.shape[0]
    x = x_nchw.reshape(B, -1).astype(jnp.float32)        # nn.Flatten
    in_f = x.shape[1]

    tm = _pick_batch_tile(B)
    b_pad = _round_up(B, tm)
    x = jnp.pad(x, ((0, b_pad - B), (0, in_pad - in_f)))  # batch + feature pad
    x = x.astype(jnp.bfloat16)                            # halve x-tile DMA

    out_pad = prepared_params[-1][0].shape[1]             # padded logits (128)

    flat_args = [x]
    in_specs = [pl.BlockSpec((tm, in_pad), lambda i: (i, 0))]
    flops = 0
    bytes_accessed = x.size * 2 + b_pad * out_pad * 4
    for (w_t, b_p) in prepared_params:
        flat_args += [w_t, b_p]
        in_specs += [
            # Resident for the whole kernel; constant index_map => 1 buffer.
            pl.BlockSpec(w_t.shape, lambda i: (0, 0),
                         pipeline_mode=pl.Buffered(1)),
            pl.BlockSpec(b_p.shape, lambda i: (0, 0),
                         pipeline_mode=pl.Buffered(1)),
        ]
        flops += 2 * b_pad * w_t.shape[0] * w_t.shape[1]
        bytes_accessed += w_t.size * 2 + b_p.size * 4

    # VMEM: double-buffered x/out tiles + single-buffered weights, + headroom.
    weights_bytes = sum(w.size * 2 + b.size * 4 for (w, b) in prepared_params)
    vmem_needed = 2 * tm * in_pad * 2 + 2 * tm * out_pad * 4 + weights_bytes
    vmem_limit = min(int(vmem_needed * 1.5) + (4 << 20), 64 << 20)

    out_full = pl.pallas_call(
        _mlp_fused_kernel,
        out_shape=jax.ShapeDtypeStruct((b_pad, out_pad), jnp.float32),
        grid=(b_pad // tm,),
        in_specs=in_specs,
        out_specs=pl.BlockSpec((tm, out_pad), lambda i: (i, 0)),
        compiler_params=pltpu.CompilerParams(
            dimension_semantics=("parallel",),
            vmem_limit_bytes=vmem_limit),
        cost_estimate=pl.CostEstimate(
            flops=flops, transcendentals=0, bytes_accessed=bytes_accessed),
    )(*flat_args)

    # Drop batch padding and padded logit lanes.
    return out_full[:B, :n_classes]


if __name__ == "__main__":
    key = jax.random.PRNGKey(0)
    k_in, k_params = jax.random.split(key)

    # Small, MNIST-consistent shapes: batch=2, 1x28x28 images.
    B, C, H, W = 2, 1, 28, 28
    blocks = (128, 64)
    n_classes = 10

    x = jax.random.normal(k_in, (B, C, H, W), dtype=jnp.float32)
    params = init_mlp_params(k_params, blocks, in_features=C * H * W,
                             n_classes=n_classes)
    prepared, in_pad = prepare_params(params, in_features=C * H * W)

    out = mlp_forward(x, prepared, in_pad, n_classes)
    out = jax.block_until_ready(out)

    assert out.shape == (B, n_classes), out.shape
    assert out.dtype == jnp.float32

    # f32 reference: same math as the PyTorch module (ReLU after every Linear,
    # including the classifier -- that's what the nn.Sequential builds).
    ref = x.reshape(B, -1)
    for (w, b) in params:
        ref = jnp.maximum(ref @ w.T + b, 0.0)
    # bf16 MXU operands with f32 accumulation => loosened tolerance.
    assert jnp.allclose(out, ref, atol=2e-2, rtol=2e-2), (
        float(jnp.max(jnp.abs(out - ref))))

    print("KERNEL_OK")
</pallas_src>

<mosaic_0001>
module attributes {stable_mosaic.version = 11 : i64} {
  func.func @_mlp_fused_kernel(%arg0: i32, %arg1: memref<16x896xbf16, #tpu.memory_space<vmem>>, %arg2: memref<896x128xbf16, #tpu.memory_space<vmem>>, %arg3: memref<1x128xf32, #tpu.memory_space<vmem>>, %arg4: memref<128x128xbf16, #tpu.memory_space<vmem>>, %arg5: memref<1x128xf32, #tpu.memory_space<vmem>>, %arg6: memref<128x128xbf16, #tpu.memory_space<vmem>>, %arg7: memref<1x128xf32, #tpu.memory_space<vmem>>, %arg8: memref<16x128xf32, #tpu.memory_space<vmem>>) attributes {dimension_semantics = [#tpu.dimension_semantics<parallel>], iteration_bounds = array<i64: 1>, scalar_prefetch = 0 : i64, scratch_operands = 0 : i64, tpu.core_type = #tpu.core_type<tc>, window_params = [{transform_indices = @transform_0, window_bounds = array<i64: 16, 896>}, {pipeline_mode = #tpu.pipeline_mode<synchronous>, transform_indices = @transform_1, window_bounds = array<i64: 896, 128>}, {pipeline_mode = #tpu.pipeline_mode<synchronous>, transform_indices = @transform_2, window_bounds = array<i64: 1, 128>}, {pipeline_mode = #tpu.pipeline_mode<synchronous>, transform_indices = @transform_3, window_bounds = array<i64: 128, 128>}, {pipeline_mode = #tpu.pipeline_mode<synchronous>, transform_indices = @transform_4, window_bounds = array<i64: 1, 128>}, {pipeline_mode = #tpu.pipeline_mode<synchronous>, transform_indices = @transform_5, window_bounds = array<i64: 128, 128>}, {pipeline_mode = #tpu.pipeline_mode<synchronous>, transform_indices = @transform_6, window_bounds = array<i64: 1, 128>}, {transform_indices = @transform_7, window_bounds = array<i64: 16, 128>}]} {
    %c0 = arith.constant 0 : index
    %c0_0 = arith.constant 0 : index
    %0 = vector.load %arg1[%c0, %c0_0] : memref<16x896xbf16, #tpu.memory_space<vmem>>, vector<16x896xbf16>
    %c0_1 = arith.constant 0 : index
    %c0_2 = arith.constant 0 : index
    %1 = vector.load %arg2[%c0_1, %c0_2] : memref<896x128xbf16, #tpu.memory_space<vmem>>, vector<896x128xbf16>
    %cst = arith.constant dense<0.000000e+00> : vector<16x128xf32>
    %2 = tpu.matmul %0, %1, %cst {dimension_numbers = #tpu.dot_dimension_numbers<[1], [0], [0], [1], [0, 0, 1, 1], [], []>} : vector<16x896xbf16>, vector<896x128xbf16>, vector<16x128xf32> -> vector<16x128xf32>
    %c0_3 = arith.constant 0 : index
    %c0_4 = arith.constant 0 : index
    %3 = vector.load %arg3[%c0_3, %c0_4] : memref<1x128xf32, #tpu.memory_space<vmem>>, vector<1x128xf32>
    %4 = vector.broadcast %3 : vector<1x128xf32> to vector<16x128xf32>
    %5 = arith.addf %2, %4 : vector<16x128xf32>
    %cst_5 = arith.constant 0.000000e+00 : f32
    %6 = vector.broadcast %cst_5 : f32 to vector<16x128xf32>
    %7 = arith.maximumf %5, %6 : vector<16x128xf32>
    %8 = arith.truncf %7 : vector<16x128xf32> to vector<16x128xbf16>
    %c0_6 = arith.constant 0 : index
    %c0_7 = arith.constant 0 : index
    %9 = vector.load %arg4[%c0_6, %c0_7] : memref<128x128xbf16, #tpu.memory_space<vmem>>, vector<128x128xbf16>
    %cst_8 = arith.constant dense<0.000000e+00> : vector<16x128xf32>
    %10 = tpu.matmul %8, %9, %cst_8 {dimension_numbers = #tpu.dot_dimension_numbers<[1], [0], [0], [1], [0, 0, 1, 1], [], []>} : vector<16x128xbf16>, vector<128x128xbf16>, vector<16x128xf32> -> vector<16x128xf32>
    %c0_9 = arith.constant 0 : index
    %c0_10 = arith.constant 0 : index
    %11 = vector.load %arg5[%c0_9, %c0_10] : memref<1x128xf32, #tpu.memory_space<vmem>>, vector<1x128xf32>
    %12 = vector.broadcast %11 : vector<1x128xf32> to vector<16x128xf32>
    %13 = arith.addf %10, %12 : vector<16x128xf32>
    %cst_11 = arith.constant 0.000000e+00 : f32
    %14 = vector.broadcast %cst_11 : f32 to vector<16x128xf32>
    %15 = arith.maximumf %13, %14 : vector<16x128xf32>
    %16 = arith.truncf %15 : vector<16x128xf32> to vector<16x128xbf16>
    %c0_12 = arith.constant 0 : index
    %c0_13 = arith.constant 0 : index
    %17 = vector.load %arg6[%c0_12, %c0_13] : memref<128x128xbf16, #tpu.memory_space<vmem>>, vector<128x128xbf16>
    %cst_14 = arith.constant dense<0.000000e+00> : vector<16x128xf32>
    %18 = tpu.matmul %16, %17, %cst_14 {dimension_numbers = #tpu.dot_dimension_numbers<[1], [0], [0], [1], [0, 0, 1, 1], [], []>} : vector<16x128xbf16>, vector<128x128xbf16>, vector<16x128xf32> -> vector<16x128xf32>
    %c0_15 = arith.constant 0 : index
    %c0_16 = arith.constant 0 : index
    %19 = vector.load %arg7[%c0_15, %c0_16] : memref<1x128xf32, #tpu.memory_space<vmem>>, vector<1x128xf32>
    %20 = vector.broadcast %19 : vector<1x128xf32> to vector<16x128xf32>
    %21 = arith.addf %18, %20 : vector<16x128xf32>
    %cst_17 = arith.constant 0.000000e+00 : f32
    %22 = vector.broadcast %cst_17 : f32 to vector<16x128xf32>
    %23 = arith.maximumf %21, %22 : vector<16x128xf32>
    %c0_18 = arith.constant 0 : index
    %c0_19 = arith.constant 0 : index
    %24 = vector.load %arg8[%c0_18, %c0_19] : memref<16x128xf32, #tpu.memory_space<vmem>>, vector<16x128xf32>
    tpu.vector_store %arg8[%c0_18, %c0_19], %23 {strides = array<i32>} : memref<16x128xf32, #tpu.memory_space<vmem>>, vector<16x128xf32>,
    return
  }
  func.func @transform_0(%arg0: i32) -> (i32, i32) {
    %c0_i32 = arith.constant 0 : i32
    %c0_i32_0 = arith.constant 0 : i32
    return %arg0, %c0_i32 : i32, i32
  }
  func.func @transform_1(%arg0: i32) -> (i32, i32) {
    %c0_i32 = arith.constant 0 : i32
    %c0_i32_0 = arith.constant 0 : i32
    %c0_i32_1 = arith.constant 0 : i32
    return %c0_i32, %c0_i32_0 : i32, i32
  }
  func.func @transform_2(%arg0: i32) -> (i32, i32) {
    %c0_i32 = arith.constant 0 : i32
    %c0_i32_0 = arith.constant 0 : i32
    %c0_i32_1 = arith.constant 0 : i32
    return %c0_i32, %c0_i32_0 : i32, i32
  }
  func.func @transform_3(%arg0: i32) -> (i32, i32) {
    %c0_i32 = arith.constant 0 : i32
    %c0_i32_0 = arith.constant 0 : i32
    %c0_i32_1 = arith.constant 0 : i32
    return %c0_i32, %c0_i32_0 : i32, i32
  }
  func.func @transform_4(%arg0: i32) -> (i32, i32) {
    %c0_i32 = arith.constant 0 : i32
    %c0_i32_0 = arith.constant 0 : i32
    %c0_i32_1 = arith.constant 0 : i32
    return %c0_i32, %c0_i32_0 : i32, i32
  }
  func.func @transform_5(%arg0: i32) -> (i32, i32) {
    %c0_i32 = arith.constant 0 : i32
    %c0_i32_0 = arith.constant 0 : i32
    %c0_i32_1 = arith.constant 0 : i32
    return %c0_i32, %c0_i32_0 : i32, i32
  }
  func.func @transform_6(%arg0: i32) -> (i32, i32) {
    %c0_i32 = arith.constant 0 : i32
    %c0_i32_0 = arith.constant 0 : i32
    %c0_i32_1 = arith.constant 0 : i32
    return %c0_i32, %c0_i32_0 : i32, i32
  }
  func.func @transform_7(%arg0: i32) -> (i32, i32) {
    %c0_i32 = arith.constant 0 : i32
    %c0_i32_0 = arith.constant 0 : i32
    return %arg0, %c0_i32 : i32, i32
  }
}

</mosaic_0001>

<llo_original>
// kernel: tpu_custom_call.1
$region0: #{tpu_custom_call.1}
  #allocation0 [shape = 'u32[]', space=smem, size = 0x4, offset = 0x4, fixed_abs, tag = 'smem constant byte address 0x4 - core index']
  #allocation1 [shape = 'u32[144,128]{1,0:T(1,128)}', space=vmem, size = 0x12000, scoped, tag = 'internal scratch']
  %s0 = inlined_call_operand.hbm [shape: bf16[16,896], index: 0, kind: input, shape index: {}]
  %s1 = inlined_call_operand.hbm [shape: bf16[896,128], index: 1, kind: input, shape index: {}]
  %s2 = inlined_call_operand.vmem [shape: f32[1,128], index: 2, kind: input, shape index: {}]
  %s3 = inlined_call_operand.hbm [shape: bf16[128,128], index: 3, kind: input, shape index: {}]
  %s4 = inlined_call_operand.vmem [shape: f32[1,128], index: 4, kind: input, shape index: {}]
  %s5 = inlined_call_operand.hbm [shape: bf16[128,128], index: 5, kind: input, shape index: {}]
  %s6 = inlined_call_operand.vmem [shape: f32[1,128], index: 6, kind: input, shape index: {}]
  %s7 = inlined_call_operand.hbm [shape: f32[16,128], index: 7, kind: output, shape index: {}]
  %s8 = sld [smem:[#allocation0]]
  $region54: #{tpu_custom_call.1} parent=0
    _
  %s10 = ssub.s32 1, %s8
  %s11 = scalar_select 0, %s10, %s8
  $region1: #{tpu_custom_call.1} parent=0
    #allocation2 [shape = 'u8[28672]{0}', space=vmem, size = 0x7000, scoped, tag = 'input window, operand 0, single buffered']
    #allocation3 [shape = 's32[1]{0}', space=sflag, size = 0x4, scoped, tag = 'scoped memory for tpu_custom_call.1']
    #allocation4 [shape = 's32[1]{0}', space=sflag, size = 0x4, scoped, tag = 'scoped memory for tpu_custom_call.1']
    #allocation5 [shape = 'u8[229376]{0}', space=vmem, size = 0x38000, scoped, tag = 'input window, operand 1, single buffered']
    #allocation6 [shape = 's32[1]{0}', space=sflag, size = 0x4, scoped, tag = 'scoped memory for tpu_custom_call.1']
    #allocation7 [shape = 'u8[32768]{0}', space=vmem, size = 0x8000, scoped, tag = 'input window, operand 3, single buffered']
    #allocation8 [shape = 'u8[32768]{0}', space=vmem, size = 0x8000, scoped, tag = 'input window, operand 5, single buffered']
    #allocation9 [shape = 's32[1]{0}', space=sflag, size = 0x4, scoped, tag = 'scoped memory for tpu_custom_call.1']
    #allocation10 [shape = 'u8[8192]{0}', space=vmem, size = 0x2000, scoped, tag = 'output window, operand 0, single buffered']
    %12 = vsyncpa [#allocation3], 0
    %13 = vsyncpa [#allocation6], 0
    %14 = vsyncpa [#allocation9], 0
    %15 = vsyncpa [#allocation4], 0
    // Predicated region
    $region2: #{tpu_custom_call.1} parent=1 // pred_check
      _
    $region3: #{tpu_custom_call.1} parent=1 // pred_check_branch
      %17 = sbr.rel (0) target = $region5
    $region4: #{tpu_custom_call.1} parent=1 // pred_region
      %s19 = ssub.s32 896, 896
      %20 = vsyncadd [#allocation3], %s19
      %s21 = sshll.u32 [#allocation2], 4
      %s22 = int_to_ptr.vmem [resolvable:$true] %s21
      %27 = dma.hbm_to_vmem [thread:$0]  %s0, 896, %s22, [#allocation3], 448, 448, 28
    $region5: #{tpu_custom_call.1} parent=1 // pred_fallthru
      _
    // Predicated region
    $region6: #{tpu_custom_call.1} parent=1 // pred_check
      _
    $region7: #{tpu_custom_call.1} parent=1 // pred_check_branch
      %29 = sbr.rel (0) target = $region9
    $region8: #{tpu_custom_call.1} parent=1 // pred_region
      %s31 = ssub.s32 7168, 7168
      %32 = vsyncadd [#allocation6], %s31
      %s33 = sshll.u32 [#allocation5], 4
      %s34 = int_to_ptr.vmem [resolvable:$true] %s33
      %39 = dma.hbm_to_vmem [thread:$0]  %s1, 7168, %s34, [#allocation6], 64, 64, 4
    $region9: #{tpu_custom_call.1} parent=1 // pred_fallthru
      _
    // Predicated region
    $region10: #{tpu_custom_call.1} parent=1 // pred_check
      _
    $region11: #{tpu_custom_call.1} parent=1 // pred_check_branch
      %41 = sbr.rel (0) target = $region13
    $region12: #{tpu_custom_call.1} parent=1 // pred_region
      _
    $region13: #{tpu_custom_call.1} parent=1 // pred_fallthru
      _
    // Predicated region
    $region14: #{tpu_custom_call.1} parent=1 // pred_check
      _
    $region15: #{tpu_custom_call.1} parent=1 // pred_check_branch
      %43 = sbr.rel (0) target = $region17
    $region16: #{tpu_custom_call.1} parent=1 // pred_region
      %s45 = ssub.s32 1024, 1024
      %46 = vsyncadd [#allocation6], %s45
      %s47 = sshll.u32 [#allocation7], 4
      %s48 = int_to_ptr.vmem [resolvable:$true] %s47
      %53 = dma.hbm_to_vmem [thread:$0]  %s3, 1024, %s48, [#allocation6], 64, 64, 4
    $region17: #{tpu_custom_call.1} parent=1 // pred_fallthru
      _
    // Predicated region
    $region18: #{tpu_custom_call.1} parent=1 // pred_check
      _
    $region19: #{tpu_custom_call.1} parent=1 // pred_check_branch
      %55 = sbr.rel (0) target = $region21
    $region20: #{tpu_custom_call.1} parent=1 // pred_region
      _
    $region21: #{tpu_custom_call.1} parent=1 // pred_fallthru
      _
    // Predicated region
    $region22: #{tpu_custom_call.1} parent=1 // pred_check
      _
    $region23: #{tpu_custom_call.1} parent=1 // pred_check_branch
      %57 = sbr.rel (0) target = $region25
    $region24: #{tpu_custom_call.1} parent=1 // pred_region
      %s59 = ssub.s32 1024, 1024
      %60 = vsyncadd [#allocation9], %s59
      %s61 = sshll.u32 [#allocation8], 4
      %s62 = int_to_ptr.vmem [resolvable:$true] %s61
      %67 = dma.hbm_to_vmem [thread:$0]  %s5, 1024, %s62, [#allocation9], 64, 64, 4
    $region25: #{tpu_custom_call.1} parent=1 // pred_fallthru
      _
    // Predicated region
    $region26: #{tpu_custom_call.1} parent=1 // pred_check
      _
    $region27: #{tpu_custom_call.1} parent=1 // pred_check_branch
      %69 = sbr.rel (0) target = $region29
    $region28: #{tpu_custom_call.1} parent=1 // pred_region
      _
    $region29: #{tpu_custom_call.1} parent=1 // pred_fallthru
      _
    // Predicated region
    $region30: #{tpu_custom_call.1} parent=1 // pred_check
      _
    $region31: #{tpu_custom_call.1} parent=1 // pred_check_branch
      %71 = sbr.rel (0) target = $region33
    $region32: #{tpu_custom_call.1} parent=1 // pred_region
      %72 = dma.done [#allocation3], 896
    $region33: #{tpu_custom_call.1} parent=1 // pred_fallthru
      _
    // Predicated region
    $region34: #{tpu_custom_call.1} parent=1 // pred_check
      _
    $region35: #{tpu_custom_call.1} parent=1 // pred_check_branch
      %74 = sbr.rel (0) target = $region37
    $region36: #{tpu_custom_call.1} parent=1 // pred_region
      %75 = dma.done [#allocation6], 7168
    $region37: #{tpu_custom_call.1} parent=1 // pred_fallthru
      _
    // Predicated region
    $region38: #{tpu_custom_call.1} parent=1 // pred_check
      _
    $region39: #{tpu_custom_call.1} parent=1 // pred_check_branch
      %77 = sbr.rel (0) target = $region41
    $region40: #{tpu_custom_call.1} parent=1 // pred_region
      %78 = dma.done [#allocation6], 1024
    $region41: #{tpu_custom_call.1} parent=1 // pred_fallthru
      _
    // Predicated region
    $region42: #{tpu_custom_call.1} parent=1 // pred_check
      _
    $region43: #{tpu_custom_call.1} parent=1 // pred_check_branch
      %80 = sbr.rel (0) target = $region45
    $region44: #{tpu_custom_call.1} parent=1 // pred_region
      %81 = dma.done [#allocation9], 1024
    $region45: #{tpu_custom_call.1} parent=1 // pred_fallthru
      _
    %v83 = vld [vmem:[#allocation2] sm:$0xff]
    %v84 = vld [vmem:[#allocation2 + $0x8] sm:$0xff]
    %v85 = vld [vmem:[#allocation2 + $0x10] sm:$0xff]
    %v86 = vld [vmem:[#allocation2 + $0x18] sm:$0xf]
    %v87 = vld [vmem:[#allocation2 + $0x1c] sm:$0xff]
    %v88 = vld [vmem:[#allocation2 + $0x24] sm:$0xff]
    %v89 = vld [vmem:[#allocation2 + $0x2c] sm:$0xff]
    %v90 = vld [vmem:[#allocation2 + $0x34] sm:$0xf]
    %v91 = vld [vmem:[#allocation5] sm:$0xf]
    %v92 = vld [vmem:[#allocation5 + $0x4] sm:$0xf]
    %v93 = vld [vmem:[#allocation5 + $0x8] sm:$0xf]
    %v94 = vld [vmem:[#allocation5 + $0xc] sm:$0xf]
    %v95 = vld [vmem:[#allocation5 + $0x10] sm:$0xf]
    %v96 = vld [vmem:[#allocation5 + $0x14] sm:$0xf]
    %v97 = vld [vmem:[#allocation5 + $0x18] sm:$0xf]
    %v98 = vld [vmem:[#allocation5 + $0x1c] sm:$0xf]
    %v99 = vld [vmem:[#allocation5 + $0x20] sm:$0xf]
    %v100 = vld [vmem:[#allocation5 + $0x24] sm:$0xf]
    %v101 = vld [vmem:[#allocation5 + $0x28] sm:$0xf]
    %v102 = vld [vmem:[#allocation5 + $0x2c] sm:$0xf]
    %v103 = vld [vmem:[#allocation5 + $0x30] sm:$0xf]
    %v104 = vld [vmem:[#allocation5 + $0x34] sm:$0xf]
    %v105 = vld [vmem:[#allocation5 + $0x38] sm:$0xf]
    %v106 = vld [vmem:[#allocation5 + $0x3c] sm:$0xf]
    %v107 = vld [vmem:[#allocation5 + $0x40] sm:$0xf]
    %v108 = vld [vmem:[#allocation5 + $0x44] sm:$0xf]
    %v109 = vld [vmem:[#allocation5 + $0x48] sm:$0xf]
    %v110 = vld [vmem:[#allocation5 + $0x4c] sm:$0xf]
    %v111 = vld [vmem:[#allocation5 + $0x50] sm:$0xf]
    %v112 = vld [vmem:[#allocation5 + $0x54] sm:$0xf]
    %v113 = vld [vmem:[#allocation5 + $0x58] sm:$0xf]
    %v114 = vld [vmem:[#allocation5 + $0x5c] sm:$0xf]
    %v115 = vld [vmem:[#allocation5 + $0x60] sm:$0xf]
    %v116 = vld [vmem:[#allocation5 + $0x64] sm:$0xf]
    %v117 = vld [vmem:[#allocation5 + $0x68] sm:$0xf]
    %v118 = vld [vmem:[#allocation5 + $0x6c] sm:$0xf]
    %v119 = vld [vmem:[#allocation5 + $0x70] sm:$0xf]
    %v120 = vld [vmem:[#allocation5 + $0x74] sm:$0xf]
    %v121 = vld [vmem:[#allocation5 + $0x78] sm:$0xf]
    %v122 = vld [vmem:[#allocation5 + $0x7c] sm:$0xf]
    %v123 = vld [vmem:[#allocation5 + $0x80] sm:$0xf]
    %v124 = vld [vmem:[#allocation5 + $0x84] sm:$0xf]
    %v125 = vld [vmem:[#allocation5 + $0x88] sm:$0xf]
    %v126 = vld [vmem:[#allocation5 + $0x8c] sm:$0xf]
    %v127 = vld [vmem:[#allocation5 + $0x90] sm:$0xf]
    %v128 = vld [vmem:[#allocation5 + $0x94] sm:$0xf]
    %v129 = vld [vmem:[#allocation5 + $0x98] sm:$0xf]
    %v130 = vld [vmem:[#allocation5 + $0x9c] sm:$0xf]
    %v131 = vld [vmem:[#allocation5 + $0xa0] sm:$0xf]
    %v132 = vld [vmem:[#allocation5 + $0xa4] sm:$0xf]
    %v133 = vld [vmem:[#allocation5 + $0xa8] sm:$0xf]
    %v134 = vld [vmem:[#allocation5 + $0xac] sm:$0xf]
    %v135 = vld [vmem:[#allocation5 + $0xb0] sm:$0xf]
    %v136 = vld [vmem:[#allocation5 + $0xb4] sm:$0xf]
    %v137 = vld [vmem:[#allocation5 + $0xb8] sm:$0xf]
    %v138 = vld [vmem:[#allocation5 + $0xbc] sm:$0xf]
    %v139 = vld [vmem:[#allocation5 + $0xc0] sm:$0xf]
    %v140 = vld [vmem:[#allocation5 + $0xc4] sm:$0xf]
    %v141 = vld [vmem:[#allocation5 + $0xc8] sm:$0xf]
    %v142 = vld [vmem:[#allocation5 + $0xcc] sm:$0xf]
    %v143 = vld [vmem:[#allocation5 + $0xd0] sm:$0xf]
    %v144 = vld [vmem:[#allocation5 + $0xd4] sm:$0xf]
    %v145 = vld [vmem:[#allocation5 + $0xd8] sm:$0xf]
    %v146 = vld [vmem:[#allocation5 + $0xdc] sm:$0xf]
    %v147 = vld [vmem:[#allocation5 + $0xe0] sm:$0xf]
    %v148 = vld [vmem:[#allocation5 + $0xe4] sm:$0xf]
    %v149 = vld [vmem:[#allocation5 + $0xe8] sm:$0xf]
    %v150 = vld [vmem:[#allocation5 + $0xec] sm:$0xf]
    %v151 = vld [vmem:[#allocation5 + $0xf0] sm:$0xf]
    %v152 = vld [vmem:[#allocation5 + $0xf4] sm:$0xf]
    %v153 = vld [vmem:[#allocation5 + $0xf8] sm:$0xf]
    %v154 = vld [vmem:[#allocation5 + $0xfc] sm:$0xf]
    %v155 = vld [vmem:[#allocation5 + $0x100] sm:$0xf]
    %v156 = vld [vmem:[#allocation5 + $0x104] sm:$0xf]
    %v157 = vld [vmem:[#allocation5 + $0x108] sm:$0xf]
    %v158 = vld [vmem:[#allocation5 + $0x10c] sm:$0xf]
    %v159 = vld [vmem:[#allocation5 + $0x110] sm:$0xf]
    %v160 = vld [vmem:[#allocation5 + $0x114] sm:$0xf]
    %v161 = vld [vmem:[#allocation5 + $0x118] sm:$0xf]
    %v162 = vld [vmem:[#allocation5 + $0x11c] sm:$0xf]
    %v163 = vld [vmem:[#allocation5 + $0x120] sm:$0xf]
    %v164 = vld [vmem:[#allocation5 + $0x124] sm:$0xf]
    %v165 = vld [vmem:[#allocation5 + $0x128] sm:$0xf]
    %v166 = vld [vmem:[#allocation5 + $0x12c] sm:$0xf]
    %v167 = vld [vmem:[#allocation5 + $0x130] sm:$0xf]
    %v168 = vld [vmem:[#allocation5 + $0x134] sm:$0xf]
    %v169 = vld [vmem:[#allocation5 + $0x138] sm:$0xf]
    %v170 = vld [vmem:[#allocation5 + $0x13c] sm:$0xf]
    %v171 = vld [vmem:[#allocation5 + $0x140] sm:$0xf]
    %v172 = vld [vmem:[#allocation5 + $0x144] sm:$0xf]
    %v173 = vld [vmem:[#allocation5 + $0x148] sm:$0xf]
    %v174 = vld [vmem:[#allocation5 + $0x14c] sm:$0xf]
    %v175 = vld [vmem:[#allocation5 + $0x150] sm:$0xf]
    %v176 = vld [vmem:[#allocation5 + $0x154] sm:$0xf]
    %v177 = vld [vmem:[#allocation5 + $0x158] sm:$0xf]
    %v178 = vld [vmem:[#allocation5 + $0x15c] sm:$0xf]
    %v179 = vld [vmem:[#allocation5 + $0x160] sm:$0xf]
    %v180 = vld [vmem:[#allocation5 + $0x164] sm:$0xf]
    %v181 = vld [vmem:[#allocation5 + $0x168] sm:$0xf]
    %v182 = vld [vmem:[#allocation5 + $0x16c] sm:$0xf]
    %v183 = vld [vmem:[#allocation5 + $0x170] sm:$0xf]
    %v184 = vld [vmem:[#allocation5 + $0x174] sm:$0xf]
    %v185 = vld [vmem:[#allocation5 + $0x178] sm:$0xf]
    %v186 = vld [vmem:[#allocation5 + $0x17c] sm:$0xf]
    %v187 = vld [vmem:[#allocation5 + $0x180] sm:$0xf]
    %v188 = vld [vmem:[#allocation5 + $0x184] sm:$0xf]
    %v189 = vld [vmem:[#allocation5 + $0x188] sm:$0xf]
    %v190 = vld [vmem:[#allocation5 + $0x18c] sm:$0xf]
    %v191 = vld [vmem:[#allocation5 + $0x190] sm:$0xf]
    %v192 = vld [vmem:[#allocation5 + $0x194] sm:$0xf]
    %v193 = vld [vmem:[#allocation5 + $0x198] sm:$0xf]
    %v194 = vld [vmem:[#allocation5 + $0x19c] sm:$0xf]
    %v195 = vld [vmem:[#allocation5 + $0x1a0] sm:$0xf]
    %v196 = vld [vmem:[#allocation5 + $0x1a4] sm:$0xf]
    %v197 = vld [vmem:[#allocation5 + $0x1a8] sm:$0xf]
    %v198 = vld [vmem:[#allocation5 + $0x1ac] sm:$0xf]
    %v199 = vld [vmem:[#allocation5 + $0x1b0] sm:$0xf]
    %v200 = vld [vmem:[#allocation5 + $0x1b4] sm:$0xf]
    %v201 = vld [vmem:[#allocation5 + $0x1b8] sm:$0xf]
    %v202 = vld [vmem:[#allocation5 + $0x1bc] sm:$0xf]
    %v203 = vld [vmem:[%s2] sm:$0x1]
    %v205 = vlaneseq
    %v206 = vshrl.u32 %v205, 7
    %v207 = vsub.s32 0, %v206
    %v208 = vrot.slane %v203, %v207
    %v218 = vunpack.c.l.b16 %v83
    %v219 = vunpack.c.h.b16 %v83
    %v220 = vunpack.c.l.b16 %v84
    %v221 = vunpack.c.h.b16 %v84
    %v222 = vunpack.c.l.b16 %v85
    %v223 = vunpack.c.h.b16 %v85
    %v224 = vunpack.c.l.b16 %v86
    %v225 = vunpack.c.l.b16 %v87
    %v226 = vunpack.c.h.b16 %v87
    %v227 = vunpack.c.l.b16 %v88
    %v228 = vunpack.c.h.b16 %v88
    %v229 = vunpack.c.l.b16 %v89
    %v230 = vunpack.c.h.b16 %v89
    %v231 = vunpack.c.l.b16 %v90
    %v232 = vpack.c.b16 %v225, %v218
    %v233 = vpack.c.b16 %v226, %v219
    %v234 = vpack.c.b16 %v227, %v220
    %v235 = vpack.c.b16 %v228, %v221
    %v236 = vpack.c.b16 %v229, %v222
    %v237 = vpack.c.b16 %v230, %v223
    %v238 = vpack.c.b16 %v231, %v224
    %v358 = vunpack.c.l.b16 %v91
    %v359 = vunpack.c.l.b16 %v92
    %v360 = vunpack.c.l.b16 %v93
    %v361 = vunpack.c.l.b16 %v94
    %v362 = vunpack.c.l.b16 %v95
    %v363 = vunpack.c.l.b16 %v96
    %v364 = vunpack.c.l.b16 %v97
    %v365 = vunpack.c.l.b16 %v98
    %v366 = vunpack.c.l.b16 %v99
    %v367 = vunpack.c.l.b16 %v100
    %v368 = vunpack.c.l.b16 %v101
    %v369 = vunpack.c.l.b16 %v102
    %v370 = vunpack.c.l.b16 %v103
    %v371 = vunpack.c.l.b16 %v104
    %v372 = vunpack.c.l.b16 %v105
    %v373 = vunpack.c.l.b16 %v106
    %v374 = vunpack.c.l.b16 %v107
    %v375 = vunpack.c.l.b16 %v108
    %v376 = vunpack.c.l.b16 %v109
    %v377 = vunpack.c.l.b16 %v110
    %v378 = vunpack.c.l.b16 %v111
    %v379 = vunpack.c.l.b16 %v112
    %v380 = vunpack.c.l.b16 %v113
    %v381 = vunpack.c.l.b16 %v114
    %v382 = vunpack.c.l.b16 %v115
    %v383 = vunpack.c.l.b16 %v116
    %v384 = vunpack.c.l.b16 %v117
    %v385 = vunpack.c.l.b16 %v118
    %v386 = vunpack.c.l.b16 %v119
    %v387 = vunpack.c.l.b16 %v120
    %v388 = vunpack.c.l.b16 %v121
    %v389 = vunpack.c.l.b16 %v122
    %v390 = vunpack.c.l.b16 %v123
    %v391 = vunpack.c.l.b16 %v124
    %v392 = vunpack.c.l.b16 %v125
    %v393 = vunpack.c.l.b16 %v126
    %v394 = vunpack.c.l.b16 %v127
    %v395 = vunpack.c.l.b16 %v128
    %v396 = vunpack.c.l.b16 %v129
    %v397 = vunpack.c.l.b16 %v130
    %v398 = vunpack.c.l.b16 %v131
    %v399 = vunpack.c.l.b16 %v132
    %v400 = vunpack.c.l.b16 %v133
    %v401 = vunpack.c.l.b16 %v134
    %v402 = vunpack.c.l.b16 %v135
    %v403 = vunpack.c.l.b16 %v136
    %v404 = vunpack.c.l.b16 %v137
    %v405 = vunpack.c.l.b16 %v138
    %v406 = vunpack.c.l.b16 %v139
    %v407 = vunpack.c.l.b16 %v140
    %v408 = vunpack.c.l.b16 %v141
    %v409 = vunpack.c.l.b16 %v142
    %v410 = vunpack.c.l.b16 %v143
    %v411 = vunpack.c.l.b16 %v144
    %v412 = vunpack.c.l.b16 %v145
    %v413 = vunpack.c.l.b16 %v146
    %v414 = vunpack.c.l.b16 %v147
    %v415 = vunpack.c.l.b16 %v148
    %v416 = vunpack.c.l.b16 %v149
    %v417 = vunpack.c.l.b16 %v150
    %v418 = vunpack.c.l.b16 %v151
    %v419 = vunpack.c.l.b16 %v152
    %v420 = vunpack.c.l.b16 %v153
    %v421 = vunpack.c.l.b16 %v154
    %v422 = vunpack.c.l.b16 %v155
    %v423 = vunpack.c.l.b16 %v156
    %v424 = vunpack.c.l.b16 %v157
    %v425 = vunpack.c.l.b16 %v158
    %v426 = vunpack.c.l.b16 %v159
    %v427 = vunpack.c.l.b16 %v160
    %v428 = vunpack.c.l.b16 %v161
    %v429 = vunpack.c.l.b16 %v162
    %v430 = vunpack.c.l.b16 %v163
    %v431 = vunpack.c.l.b16 %v164
    %v432 = vunpack.c.l.b16 %v165
    %v433 = vunpack.c.l.b16 %v166
    %v434 = vunpack.c.l.b16 %v167
    %v435 = vunpack.c.l.b16 %v168
    %v436 = vunpack.c.l.b16 %v169
    %v437 = vunpack.c.l.b16 %v170
    %v438 = vunpack.c.l.b16 %v171
    %v439 = vunpack.c.l.b16 %v172
    %v440 = vunpack.c.l.b16 %v173
    %v441 = vunpack.c.l.b16 %v174
    %v442 = vunpack.c.l.b16 %v175
    %v443 = vunpack.c.l.b16 %v176
    %v444 = vunpack.c.l.b16 %v177
    %v445 = vunpack.c.l.b16 %v178
    %v446 = vunpack.c.l.b16 %v179
    %v447 = vunpack.c.l.b16 %v180
    %v448 = vunpack.c.l.b16 %v181
    %v449 = vunpack.c.l.b16 %v182
    %v450 = vunpack.c.l.b16 %v183
    %v451 = vunpack.c.l.b16 %v184
    %v452 = vunpack.c.l.b16 %v185
    %v453 = vunpack.c.l.b16 %v186
    %v454 = vunpack.c.l.b16 %v187
    %v455 = vunpack.c.l.b16 %v188
    %v456 = vunpack.c.l.b16 %v189
    %v457 = vunpack.c.l.b16 %v190
    %v458 = vunpack.c.l.b16 %v191
    %v459 = vunpack.c.l.b16 %v192
    %v460 = vunpack.c.l.b16 %v193
    %v461 = vunpack.c.l.b16 %v194
    %v462 = vunpack.c.l.b16 %v195
    %v463 = vunpack.c.l.b16 %v196
    %v464 = vunpack.c.l.b16 %v197
    %v465 = vunpack.c.l.b16 %v198
    %v466 = vunpack.c.l.b16 %v199
    %v467 = vunpack.c.l.b16 %v200
    %v468 = vunpack.c.l.b16 %v201
    %v469 = vunpack.c.l.b16 %v202
    %v470 = vpack.c.b16 %v359, %v358
    %v471 = vpack.c.b16 %v361, %v360
    %v472 = vpack.c.b16 %v363, %v362
    %v473 = vpack.c.b16 %v365, %v364
    %v474 = vpack.c.b16 %v367, %v366
    %v475 = vpack.c.b16 %v369, %v368
    %v476 = vpack.c.b16 %v371, %v370
    %v477 = vpack.c.b16 %v373, %v372
    %v478 = vpack.c.b16 %v375, %v374
    %v479 = vpack.c.b16 %v377, %v376
    %v480 = vpack.c.b16 %v379, %v378
    %v481 = vpack.c.b16 %v381, %v380
    %v482 = vpack.c.b16 %v383, %v382
    %v483 = vpack.c.b16 %v385, %v384
    %v484 = vpack.c.b16 %v387, %v386
    %v485 = vpack.c.b16 %v389, %v388
    %v486 = vpack.c.b16 %v391, %v390
    %v487 = vpack.c.b16 %v393, %v392
    %v488 = vpack.c.b16 %v395, %v394
    %v489 = vpack.c.b16 %v397, %v396
    %v490 = vpack.c.b16 %v399, %v398
    %v491 = vpack.c.b16 %v401, %v400
    %v492 = vpack.c.b16 %v403, %v402
    %v493 = vpack.c.b16 %v405, %v404
    %v494 = vpack.c.b16 %v407, %v406
    %v495 = vpack.c.b16 %v409, %v408
    %v496 = vpack.c.b16 %v411, %v410
    %v497 = vpack.c.b16 %v413, %v412
    %v498 = vpack.c.b16 %v415, %v414
    %v499 = vpack.c.b16 %v417, %v416
    %v500 = vpack.c.b16 %v419, %v418
    %v501 = vpack.c.b16 %v421, %v420
    %v502 = vpack.c.b16 %v423, %v422
    %v503 = vpack.c.b16 %v425, %v424
    %v504 = vpack.c.b16 %v427, %v426
    %v505 = vpack.c.b16 %v429, %v428
    %v506 = vpack.c.b16 %v431, %v430
    %v507 = vpack.c.b16 %v433, %v432
    %v508 = vpack.c.b16 %v435, %v434
    %v509 = vpack.c.b16 %v437, %v436
    %v510 = vpack.c.b16 %v439, %v438
    %v511 = vpack.c.b16 %v441, %v440
    %v512 = vpack.c.b16 %v443, %v442
    %v513 = vpack.c.b16 %v445, %v444
    %v514 = vpack.c.b16 %v447, %v446
    %v515 = vpack.c.b16 %v449, %v448
    %v516 = vpack.c.b16 %v451, %v450
    %v517 = vpack.c.b16 %v453, %v452
    %v518 = vpack.c.b16 %v455, %v454
    %v519 = vpack.c.b16 %v457, %v456
    %v520 = vpack.c.b16 %v459, %v458
    %v521 = vpack.c.b16 %v461, %v460
    %v522 = vpack.c.b16 %v463, %v462
    %v523 = vpack.c.b16 %v465, %v464
    %v524 = vpack.c.b16 %v467, %v466
    %v525 = vpack.c.b16 %v469, %v468
    %582 = vmatprep.subr.bf16.mxu0 0
    %583 = vmatpush1.bf16.msra.mxu0 %v470
    %584 = vmatprep.subr.bf16.mxu0 0
    %585 = vmatpush1.bf16.msra.mxu0 %v471
    %586 = vmatprep.subr.bf16.mxu0 0
    %587 = vmatpush1.bf16.msra.mxu0 %v472
    %588 = vmatprep.subr.bf16.mxu0 0
    %589 = vmatpush1.bf16.msra.mxu0 %v473
    %590 = vmatprep.subr.bf16.mxu0 0
    %591 = vmatpush1.bf16.msra.mxu0 %v474
    %592 = vmatprep.subr.bf16.mxu0 0
    %593 = vmatpush1.bf16.msra.mxu0 %v475
    %594 = vmatprep.subr.bf16.mxu0 0
    %595 = vmatpush1.bf16.msra.mxu0 %v476
    %596 = vmatprep.subr.bf16.mxu0 0
    %597 = vmatpush1.bf16.msra.mxu0 %v477
    %598 = vmatprep.subr.bf16.mxu0 0
    %599 = vmatpush1.bf16.msra.mxu0 %v478
    %600 = vmatprep.subr.bf16.mxu0 0
    %601 = vmatpush1.bf16.msra.mxu0 %v479
    %602 = vmatprep.subr.bf16.mxu0 0
    %603 = vmatpush1.bf16.msra.mxu0 %v480
    %604 = vmatprep.subr.bf16.mxu0 0
    %605 = vmatpush1.bf16.msra.mxu0 %v481
    %606 = vmatprep.subr.bf16.mxu0 0
    %607 = vmatpush1.bf16.msra.mxu0 %v482
    %608 = vmatprep.subr.bf16.mxu0 0
    %609 = vmatpush1.bf16.msra.mxu0 %v483
    %610 = vmatprep.subr.bf16.mxu0 0
    %611 = vmatpush1.bf16.msra.mxu0 %v484
    %612 = vmatprep.subr.bf16.mxu0 0
    %613 = vmatpush1.bf16.msra.mxu0 %v485
    %614 = vmatprep.mubr.bf16.mxu0 %v233
    %615 = vmatmul.mubr.bf16.gmra.mrb[0].mxu0 %v232
    %v616 = vpop.f32.mrb[0].mxu0
    %v617 = vadd.f32 %v208, %v616
    %v618 = vpop.f32.mrb[0].mxu0
    %v619 = vpop.f32.mrb[0].mxu0
    %v620 = vadd.f32 %v208, %v619
    %v621 = vpop.f32.mrb[0].mxu0
    %622 = vdwg.mxu0
    %623 = vmatprep.subr.bf16.mxu0 0
    %624 = vmatpush1.bf16.msra.mxu0 %v486
    %625 = vmatprep.subr.bf16.mxu0 0
    %626 = vmatpush1.bf16.msra.mxu0 %v487
    %627 = vmatprep.subr.bf16.mxu0 0
    %628 = vmatpush1.bf16.msra.mxu0 %v488
    %629 = vmatprep.subr.bf16.mxu0 0
    %630 = vmatpush1.bf16.msra.mxu0 %v489
    %631 = vmatprep.subr.bf16.mxu0 0
    %632 = vmatpush1.bf16.msra.mxu0 %v490
    %633 = vmatprep.subr.bf16.mxu0 0
    %634 = vmatpush1.bf16.msra.mxu0 %v491
    %635 = vmatprep.subr.bf16.mxu0 0
    %636 = vmatpush1.bf16.msra.mxu0 %v492
    %637 = vmatprep.subr.bf16.mxu0 0
    %638 = vmatpush1.bf16.msra.mxu0 %v493
    %639 = vmatprep.subr.bf16.mxu0 0
    %640 = vmatpush1.bf16.msra.mxu0 %v494
    %641 = vmatprep.subr.bf16.mxu0 0
    %642 = vmatpush1.bf16.msra.mxu0 %v495
    %643 = vmatprep.subr.bf16.mxu0 0
    %644 = vmatpush1.bf16.msra.mxu0 %v496
    %645 = vmatprep.subr.bf16.mxu0 0
    %646 = vmatpush1.bf16.msra.mxu0 %v497
    %647 = vmatprep.subr.bf16.mxu0 0
    %648 = vmatpush1.bf16.msra.mxu0 %v498
    %649 = vmatprep.subr.bf16.mxu0 0
    %650 = vmatpush1.bf16.msra.mxu0 %v499
    %651 = vmatprep.subr.bf16.mxu0 0
    %652 = vmatpush1.bf16.msra.mxu0 %v500
    %653 = vmatprep.subr.bf16.mxu0 0
    %654 = vmatpush1.bf16.msra.mxu0 %v501
    %655 = vmatprep.mubr.bf16.mxu0 %v235
    %656 = vmatmul.mubr.bf16.gmra.mrb[0].mxu0 %v234
    %v657 = vpop.f32.mrb[0].mxu0
    %v658 = vadd.f32 %v617, %v657
    %v659 = vpop.f32.mrb[0].mxu0
    %v660 = vpop.f32.mrb[0].mxu0
    %v661 = vadd.f32 %v620, %v660
    %v662 = vpop.f32.mrb[0].mxu0
    %663 = vdwg.mxu0
    %664 = vmatprep.subr.bf16.mxu0 0
    %665 = vmatpush1.bf16.msra.mxu0 %v502
    %666 = vmatprep.subr.bf16.mxu0 0
    %667 = vmatpush1.bf16.msra.mxu0 %v503
    %668 = vmatprep.subr.bf16.mxu0 0
    %669 = vmatpush1.bf16.msra.mxu0 %v504
    %670 = vmatprep.subr.bf16.mxu0 0
    %671 = vmatpush1.bf16.msra.mxu0 %v505
    %672 = vmatprep.subr.bf16.mxu0 0
    %673 = vmatpush1.bf16.msra.mxu0 %v506
    %674 = vmatprep.subr.bf16.mxu0 0
    %675 = vmatpush1.bf16.msra.mxu0 %v507
    %676 = vmatprep.subr.bf16.mxu0 0
    %677 = vmatpush1.bf16.msra.mxu0 %v508
    %678 = vmatprep.subr.bf16.mxu0 0
    %679 = vmatpush1.bf16.msra.mxu0 %v509
    %680 = vmatprep.subr.bf16.mxu0 0
    %681 = vmatpush1.bf16.msra.mxu0 %v510
    %682 = vmatprep.subr.bf16.mxu0 0
    %683 = vmatpush1.bf16.msra.mxu0 %v511
    %684 = vmatprep.subr.bf16.mxu0 0
    %685 = vmatpush1.bf16.msra.mxu0 %v512
    %686 = vmatprep.subr.bf16.mxu0 0
    %687 = vmatpush1.bf16.msra.mxu0 %v513
    %688 = vmatprep.subr.bf16.mxu0 0
    %689 = vmatpush1.bf16.msra.mxu0 %v514
    %690 = vmatprep.subr.bf16.mxu0 0
    %691 = vmatpush1.bf16.msra.mxu0 %v515
    %692 = vmatprep.subr.bf16.mxu0 0
    %693 = vmatpush1.bf16.msra.mxu0 %v516
    %694 = vmatprep.subr.bf16.mxu0 0
    %695 = vmatpush1.bf16.msra.mxu0 %v517
    %696 = vmatprep.mubr.bf16.mxu0 %v237
    %697 = vmatmul.mubr.bf16.gmra.mrb[0].mxu0 %v236
    %v698 = vpop.f32.mrb[0].mxu0
    %v699 = vadd.f32 %v658, %v698
    %v700 = vpop.f32.mrb[0].mxu0
    %v701 = vpop.f32.mrb[0].mxu0
    %v702 = vadd.f32 %v661, %v701
    %v703 = vpop.f32.mrb[0].mxu0
    %704 = vdwg.mxu0
    %705 = vmatprep.subr.bf16.mxu0 0
    %706 = vmatpush1.bf16.msra.mxu0 %v518
    %707 = vmatprep.subr.bf16.mxu0 0
    %708 = vmatpush1.bf16.msra.mxu0 %v519
    %709 = vmatprep.subr.bf16.mxu0 0
    %710 = vmatpush1.bf16.msra.mxu0 %v520
    %711 = vmatprep.subr.bf16.mxu0 0
    %712 = vmatpush1.bf16.msra.mxu0 %v521
    %713 = vmatprep.subr.bf16.mxu0 0
    %714 = vmatpush1.bf16.msra.mxu0 %v522
    %715 = vmatprep.subr.bf16.mxu0 0
    %716 = vmatpush1.bf16.msra.mxu0 %v523
    %717 = vmatprep.subr.bf16.mxu0 0
    %718 = vmatpush1.bf16.msra.mxu0 %v524
    %719 = vmatprep.subr.bf16.mxu0 0
    %720 = vmatpush1.bf16.msra.mxu0 %v525
    %721 = vmatprep.subr.bf16.mxu0 0
    %722 = vmatpush1.bf16.msra.mxu0 0
    %723 = vmatprep.subr.bf16.mxu0 0
    %724 = vmatpush1.bf16.msra.mxu0 0
    %725 = vmatprep.subr.bf16.mxu0 0
    %726 = vmatpush1.bf16.msra.mxu0 0
    %727 = vmatprep.subr.bf16.mxu0 0
    %728 = vmatpush1.bf16.msra.mxu0 0
    %729 = vmatprep.subr.bf16.mxu0 0
    %730 = vmatpush1.bf16.msra.mxu0 0
    %731 = vmatprep.subr.bf16.mxu0 0
    %732 = vmatpush1.bf16.msra.mxu0 0
    %733 = vmatprep.subr.bf16.mxu0 0
    %734 = vmatpush1.bf16.msra.mxu0 0
    %735 = vmatprep.subr.bf16.mxu0 0
    %736 = vmatpush1.bf16.msra.mxu0 0
    %737 = vmatprep.mubr.bf16.mxu0 0
    %738 = vmatmul.mubr.bf16.gmra.mrb[0].mxu0 %v238
    %v739 = vpop.f32.mrb[0].mxu0
    %v740 = vadd.f32 %v699, %v739
    %v741 = vpop.f32.mrb[0].mxu0
    %v742 = vpop.f32.mrb[0].mxu0
    %v743 = vadd.f32 %v702, %v742
    %v744 = vpop.f32.mrb[0].mxu0
    %745 = vdwg.mxu0
    %v746 = vmax.f32 %v740, 0.0
    %v747 = vmax.f32 %v743, 0.0
    %v748 = vpack.c.bf16 %v747, %v746
    %v749 = vld [vmem:[#allocation7] sm:$0xf]
    %v750 = vld [vmem:[#allocation7 + $0x4] sm:$0xf]
    %v751 = vld [vmem:[#allocation7 + $0x8] sm:$0xf]
    %v752 = vld [vmem:[#allocation7 + $0xc] sm:$0xf]
    %v753 = vld [vmem:[#allocation7 + $0x10] sm:$0xf]
    %v754 = vld [vmem:[#allocation7 + $0x14] sm:$0xf]
    %v755 = vld [vmem:[#allocation7 + $0x18] sm:$0xf]
    %v756 = vld [vmem:[#allocation7 + $0x1c] sm:$0xf]
    %v757 = vld [vmem:[#allocation7 + $0x20] sm:$0xf]
    %v758 = vld [vmem:[#allocation7 + $0x24] sm:$0xf]
    %v759 = vld [vmem:[#allocation7 + $0x28] sm:$0xf]
    %v760 = vld [vmem:[#allocation7 + $0x2c] sm:$0xf]
    %v761 = vld [vmem:[#allocation7 + $0x30] sm:$0xf]
    %v762 = vld [vmem:[#allocation7 + $0x34] sm:$0xf]
    %v763 = vld [vmem:[#allocation7 + $0x38] sm:$0xf]
    %v764 = vld [vmem:[#allocation7 + $0x3c] sm:$0xf]
    %v765 = vld [vmem:[%s4] sm:$0x1]
    %v767 = vlaneseq
    %v768 = vshrl.u32 %v767, 7
    %v769 = vsub.s32 0, %v768
    %v770 = vrot.slane %v765, %v769
    %v788 = vunpack.c.l.b16 %v749
    %v789 = vunpack.c.l.b16 %v750
    %v790 = vunpack.c.l.b16 %v751
    %v791 = vunpack.c.l.b16 %v752
    %v792 = vunpack.c.l.b16 %v753
    %v793 = vunpack.c.l.b16 %v754
    %v794 = vunpack.c.l.b16 %v755
    %v795 = vunpack.c.l.b16 %v756
    %v796 = vunpack.c.l.b16 %v757
    %v797 = vunpack.c.l.b16 %v758
    %v798 = vunpack.c.l.b16 %v759
    %v799 = vunpack.c.l.b16 %v760
    %v800 = vunpack.c.l.b16 %v761
    %v801 = vunpack.c.l.b16 %v762
    %v802 = vunpack.c.l.b16 %v763
    %v803 = vunpack.c.l.b16 %v764
    %v804 = vpack.c.b16 %v789, %v788
    %v805 = vpack.c.b16 %v791, %v790
    %v806 = vpack.c.b16 %v793, %v792
    %v807 = vpack.c.b16 %v795, %v794
    %v808 = vpack.c.b16 %v797, %v796
    %v809 = vpack.c.b16 %v799, %v798
    %v810 = vpack.c.b16 %v801, %v800
    %v811 = vpack.c.b16 %v803, %v802
    %820 = vmatprep.subr.bf16.mxu0 0
    %821 = vmatpush1.bf16.msra.mxu0 %v804
    %822 = vmatprep.subr.bf16.mxu0 0
    %823 = vmatpush1.bf16.msra.mxu0 %v805
    %824 = vmatprep.subr.bf16.mxu0 0
    %825 = vmatpush1.bf16.msra.mxu0 %v806
    %826 = vmatprep.subr.bf16.mxu0 0
    %827 = vmatpush1.bf16.msra.mxu0 %v807
    %828 = vmatprep.subr.bf16.mxu0 0
    %829 = vmatpush1.bf16.msra.mxu0 %v808
    %830 = vmatprep.subr.bf16.mxu0 0
    %831 = vmatpush1.bf16.msra.mxu0 %v809
    %832 = vmatprep.subr.bf16.mxu0 0
    %833 = vmatpush1.bf16.msra.mxu0 %v810
    %834 = vmatprep.subr.bf16.mxu0 0
    %835 = vmatpush1.bf16.msra.mxu0 %v811
    %836 = vmatprep.subr.bf16.mxu0 0
    %837 = vmatpush1.bf16.msra.mxu0 0
    %838 = vmatprep.subr.bf16.mxu0 0
    %839 = vmatpush1.bf16.msra.mxu0 0
    %840 = vmatprep.subr.bf16.mxu0 0
    %841 = vmatpush1.bf16.msra.mxu0 0
    %842 = vmatprep.subr.bf16.mxu0 0
    %843 = vmatpush1.bf16.msra.mxu0 0
    %844 = vmatprep.subr.bf16.mxu0 0
    %845 = vmatpush1.bf16.msra.mxu0 0
    %846 = vmatprep.subr.bf16.mxu0 0
    %847 = vmatpush1.bf16.msra.mxu0 0
    %848 = vmatprep.subr.bf16.mxu0 0
    %849 = vmatpush1.bf16.msra.mxu0 0
    %850 = vmatprep.subr.bf16.mxu0 0
    %851 = vmatpush1.bf16.msra.mxu0 0
    %852 = vmatprep.mubr.bf16.mxu0 0
    %853 = vmatmul.mubr.bf16.gmra.mrb[0].mxu0 %v748
    %v854 = vpop.f32.mrb[0].mxu0
    %v855 = vadd.f32 %v770, %v854
    %v856 = vpop.f32.mrb[0].mxu0
    %v857 = vpop.f32.mrb[0].mxu0
    %v858 = vadd.f32 %v770, %v857
    %v859 = vpop.f32.mrb[0].mxu0
    %860 = vdwg.mxu0
    %v861 = vmax.f32 %v855, 0.0
    %v862 = vmax.f32 %v858, 0.0
    %v863 = vpack.c.bf16 %v862, %v861
    %v864 = vld [vmem:[#allocation8] sm:$0xf]
    %v865 = vld [vmem:[#allocation8 + $0x4] sm:$0xf]
    %v866 = vld [vmem:[#allocation8 + $0x8] sm:$0xf]
    %v867 = vld [vmem:[#allocation8 + $0xc] sm:$0xf]
    %v868 = vld [vmem:[#allocation8 + $0x10] sm:$0xf]
    %v869 = vld [vmem:[#allocation8 + $0x14] sm:$0xf]
    %v870 = vld [vmem:[#allocation8 + $0x18] sm:$0xf]
    %v871 = vld [vmem:[#allocation8 + $0x1c] sm:$0xf]
    %v872 = vld [vmem:[#allocation8 + $0x20] sm:$0xf]
    %v873 = vld [vmem:[#allocation8 + $0x24] sm:$0xf]
    %v874 = vld [vmem:[#allocation8 + $0x28] sm:$0xf]
    %v875 = vld [vmem:[#allocation8 + $0x2c] sm:$0xf]
    %v876 = vld [vmem:[#allocation8 + $0x30] sm:$0xf]
    %v877 = vld [vmem:[#allocation8 + $0x34] sm:$0xf]
    %v878 = vld [vmem:[#allocation8 + $0x38] sm:$0xf]
    %v879 = vld [vmem:[#allocation8 + $0x3c] sm:$0xf]
    %v880 = vld [vmem:[%s6] sm:$0x1]
    %v882 = vlaneseq
    %v883 = vshrl.u32 %v882, 7
    %v884 = vsub.s32 0, %v883
    %v885 = vrot.slane %v880, %v884
    %v903 = vunpack.c.l.b16 %v864
    %v904 = vunpack.c.l.b16 %v865
    %v905 = vunpack.c.l.b16 %v866
    %v906 = vunpack.c.l.b16 %v867
    %v907 = vunpack.c.l.b16 %v868
    %v908 = vunpack.c.l.b16 %v869
    %v909 = vunpack.c.l.b16 %v870
    %v910 = vunpack.c.l.b16 %v871
    %v911 = vunpack.c.l.b16 %v872
    %v912 = vunpack.c.l.b16 %v873
    %v913 = vunpack.c.l.b16 %v874
    %v914 = vunpack.c.l.b16 %v875
    %v915 = vunpack.c.l.b16 %v876
    %v916 = vunpack.c.l.b16 %v877
    %v917 = vunpack.c.l.b16 %v878
    %v918 = vunpack.c.l.b16 %v879
    %v919 = vpack.c.b16 %v904, %v903
    %v920 = vpack.c.b16 %v906, %v905
    %v921 = vpack.c.b16 %v908, %v907
    %v922 = vpack.c.b16 %v910, %v909
    %v923 = vpack.c.b16 %v912, %v911
    %v924 = vpack.c.b16 %v914, %v913
    %v925 = vpack.c.b16 %v916, %v915
    %v926 = vpack.c.b16 %v918, %v917
    %935 = vmatprep.subr.bf16.mxu0 0
    %936 = vmatpush1.bf16.msra.mxu0 %v919
    %937 = vmatprep.subr.bf16.mxu0 0
    %938 = vmatpush1.bf16.msra.mxu0 %v920
    %939 = vmatprep.subr.bf16.mxu0 0
    %940 = vmatpush1.bf16.msra.mxu0 %v921
    %941 = vmatprep.subr.bf16.mxu0 0
    %942 = vmatpush1.bf16.msra.mxu0 %v922
    %943 = vmatprep.subr.bf16.mxu0 0
    %944 = vmatpush1.bf16.msra.mxu0 %v923
    %945 = vmatprep.subr.bf16.mxu0 0
    %946 = vmatpush1.bf16.msra.mxu0 %v924
    %947 = vmatprep.subr.bf16.mxu0 0
    %948 = vmatpush1.bf16.msra.mxu0 %v925
    %949 = vmatprep.subr.bf16.mxu0 0
    %950 = vmatpush1.bf16.msra.mxu0 %v926
    %951 = vmatprep.subr.bf16.mxu0 0
    %952 = vmatpush1.bf16.msra.mxu0 0
    %953 = vmatprep.subr.bf16.mxu0 0
    %954 = vmatpush1.bf16.msra.mxu0 0
    %955 = vmatprep.subr.bf16.mxu0 0
    %956 = vmatpush1.bf16.msra.mxu0 0
    %957 = vmatprep.subr.bf16.mxu0 0
    %958 = vmatpush1.bf16.msra.mxu0 0
    %959 = vmatprep.subr.bf16.mxu0 0
    %960 = vmatpush1.bf16.msra.mxu0 0
    %961 = vmatprep.subr.bf16.mxu0 0
    %962 = vmatpush1.bf16.msra.mxu0 0
    %963 = vmatprep.subr.bf16.mxu0 0
    %964 = vmatpush1.bf16.msra.mxu0 0
    %965 = vmatprep.subr.bf16.mxu0 0
    %966 = vmatpush1.bf16.msra.mxu0 0
    %967 = vmatprep.mubr.bf16.mxu0 0
    %968 = vmatmul.mubr.bf16.gmra.mrb[0].mxu0 %v863
    %v969 = vpop.f32.mrb[0].mxu0
    %v970 = vadd.f32 %v885, %v969
    %v971 = vpop.f32.mrb[0].mxu0
    %v972 = vpop.f32.mrb[0].mxu0
    %v973 = vadd.f32 %v885, %v972
    %v974 = vpop.f32.mrb[0].mxu0
    %975 = vdwg.mxu0
    %v976 = vmax.f32 %v970, 0.0
    %v977 = vmax.f32 %v973, 0.0
    %978 = vst [vmem:[#allocation10] sm:$0xff] %v976
    %979 = vst [vmem:[#allocation10 + $0x8] sm:$0xff] %v977
    // Predicated region
    $region46: #{tpu_custom_call.1} parent=1 // pred_check
      _
    $region47: #{tpu_custom_call.1} parent=1 // pred_check_branch
      %981 = sbr.rel (0) target = $region49
    $region48: #{tpu_custom_call.1} parent=1 // pred_region
      %s983 = ssub.s32 256, 256
      %984 = vsyncadd [#allocation4], %s983
      %s985 = sshll.u32 [#allocation10], 4
      %s986 = int_to_ptr.vmem [resolvable:$true] %s985
      %991 = dma.vmem_to_hbm [thread:$0]  %s986, 256, %s7, [#allocation4], 128, 128, 8
    $region49: #{tpu_custom_call.1} parent=1 // pred_fallthru
      _
    // Predicated region
    $region50: #{tpu_custom_call.1} parent=1 // pred_check
      _
    $region51: #{tpu_custom_call.1} parent=1 // pred_check_branch
      %993 = sbr.rel (0) target = $region53
    $region52: #{tpu_custom_call.1} parent=1 // pred_region
      %994 = dma.done [#allocation4], 256
    $region53: #{tpu_custom_call.1} parent=1 // pred_fallthru
      _
    %995 = vsyncpa [#allocation3], 1
    %996 = vsyncpa [#allocation6], 1
    %997 = vsyncpa [#allocation9], 1
    %998 = vsyncpa [#allocation4], 1

</llo_original>
